<compile_context>
chip_gen: v5e
topology: v5e:2x2
jax: 0.10.0
libtpu: 0.0.40
codegen_flags: <defaults>
</compile_context>

<pallas_src>
import functools

import jax
import jax.numpy as jnp
from jax.experimental import pallas as pl
from jax.experimental.pallas import tpu as pltpu


def _round_up(x, m):
    return (x + m - 1) // m * m


def _vmem_cap_bytes():
    # Scoped-VMEM cap from the actual chip (v7x: 64 MiB physical, v5e/v6e:
    # 128 MiB), with ~15% headroom for compiler scratch.  Conservative
    # fallback if the query is unavailable.
    try:
        cap = int(pltpu.get_tpu_info().vmem_capacity_bytes)
    except Exception:
        cap = 64 * 1024 * 1024
    return int(cap * 0.85)


# --------------------------------------------------------------------------- #
# Pass 1: raw logits (vocab-tiled, f32) + per-row log-sum-exp.
# --------------------------------------------------------------------------- #
def _logits_lse_kernel(x_ref, w_ref, b_ref, logits_ref, lse_ref, m_ref, l_ref):
    j = pl.program_id(1)

    @pl.when(j == 0)
    def _init():
        m_ref[...] = jnp.full(m_ref.shape, -jnp.inf, dtype=m_ref.dtype)
        l_ref[...] = jnp.zeros(l_ref.shape, dtype=l_ref.dtype)

    # MXU matmul for this vocab tile: bf16 inputs, f32 accumulation.
    # TODO(synk): for small d_model the bias add + exp/reduce is the binding
    # VPU/EUP work, not the MXU; folding the bias into the matmul would remove
    # one VPU pass + one DMA stream per step.
    logits = jnp.dot(x_ref[...], w_ref[...], preferred_element_type=jnp.float32)
    logits = logits + b_ref[...]                       # (tm, tv) f32

    # Online log-sum-exp accumulators (per row), numerically stable.
    m_prev = m_ref[...]
    m_new = jnp.maximum(m_prev, jnp.max(logits, axis=-1, keepdims=True))
    l_ref[...] = l_ref[...] * jnp.exp(m_prev - m_new) + jnp.sum(
        jnp.exp(logits - m_new), axis=-1, keepdims=True
    )
    m_ref[...] = m_new

    # Stream this tile's raw f32 logits straight out (no resident vocab block,
    # no finalize epilogue).
    logits_ref[...] = logits

    # Last vocab tile: emit the per-row LSE for the streamed correction pass.
    @pl.when(j == pl.num_programs(1) - 1)
    def _emit_lse():
        lse_ref[...] = m_ref[...] + jnp.log(l_ref[...])


# --------------------------------------------------------------------------- #
# Pass 2: log_softmax = logits - lse (streamed, lane-dense tiles).
# --------------------------------------------------------------------------- #
def _sub_lse_kernel(logits_ref, lse_ref, o_ref):
    o_ref[...] = (logits_ref[...] - lse_ref[...]).astype(o_ref.dtype)


# --------------------------------------------------------------------------- #
# Parameter staging (do this ONCE; store the results as the persistent params).
# --------------------------------------------------------------------------- #
def prepare_generator_params(w, b, *, tv=512, compute_dtype=jnp.bfloat16):
    """Pre-cast / pre-pad the Generator parameters once.

    w: (d_model, vocab)  -- nn.Linear(d_model, vocab).weight transposed.
    b: (vocab,)
    Returns (w_p, b_p, vocab, tv) where w_p is (d_model, vocab_p) bf16 and
    b_p is (1, vocab_p) f32 with -1e30 in padded columns (so exp() == 0 and
    padding never wins the running max)."""
    d_model, vocab = w.shape
    tv = min(tv, _round_up(vocab, 128))
    vocab_p = _round_up(vocab, tv)
    w_p = w.astype(compute_dtype)
    b_p = b.astype(jnp.float32).reshape(1, vocab)
    if vocab_p != vocab:
        w_p = jnp.pad(w_p, ((0, 0), (0, vocab_p - vocab)))
        b_p = jnp.pad(b_p, ((0, 0), (0, vocab_p - vocab)), constant_values=-1e30)
    return w_p, b_p, vocab, tv


def _pass1_vmem_est(tm, tv, d_model, cd_bytes):
    return (2 * tm * d_model * cd_bytes      # x tiles (double-buffered)
            + 2 * d_model * tv * cd_bytes    # weight tiles
            + 2 * 8 * tv * 4                 # bias tiles (sublane-padded)
            + 2 * tm * tv * 4                # streamed f32 logits tiles
            + 2 * tm * 4                     # lse output block
            + 2 * tm * 4)                    # m/l scratch


# --------------------------------------------------------------------------- #
# Forward with pre-staged params.
# --------------------------------------------------------------------------- #
def generator_forward_prepared(x, w_p, b_p, vocab, tv, *, tm=512, out_dtype=None):
    """log_softmax(x @ W + b, axis=-1) with pre-staged parameters.

    x: (batch, seq, d_model); w_p/b_p from prepare_generator_params.
    Returns (batch, seq, vocab) in out_dtype (defaults to x.dtype)."""
    batch, seq, d_model = x.shape
    d_model_w, vocab_p = w_p.shape
    assert d_model == d_model_w
    if out_dtype is None:
        out_dtype = x.dtype
    compute_dtype = w_p.dtype
    cd_bytes = jnp.dtype(compute_dtype).itemsize
    out_bytes = jnp.dtype(out_dtype).itemsize

    M = batch * seq
    # Big row tile to cut (M/tm)x weight re-streaming; shrink for tiny inputs.
    tm = max(8, min(tm, _round_up(M, 8)))
    # TODO(synk): for decode-sized M (single row tile) on v7x, split the vocab
    # axis across the 2 TensorCores with per-core partial (m, l) merged at end.

    vmem_cap = _vmem_cap_bytes()
    # Shrink tm, then tv, until the pass-1 tile footprint fits the chip's VMEM.
    while _pass1_vmem_est(tm, tv, d_model, cd_bytes) > vmem_cap and tm > 128:
        tm = max(128, _round_up(tm // 2, 8))
    while (_pass1_vmem_est(tm, tv, d_model, cd_bytes) > vmem_cap
           and tv > 128 and (tv // 2) % 128 == 0 and vocab_p % (tv // 2) == 0):
        tv //= 2

    M_p = _round_up(M, tm)
    num_v = vocab_p // tv

    # Wrapper-side activation layout (cheap; activations are small vs weight).
    x2 = x.reshape(M, d_model).astype(compute_dtype)
    if M_p != M:
        x2 = jnp.pad(x2, ((0, M_p - M), (0, 0)))

    est1 = _pass1_vmem_est(tm, tv, d_model, cd_bytes)
    vmem_limit1 = int(min(vmem_cap, max(int(1.5 * est1), 32 * 1024 * 1024)))

    logits_f32, lse = pl.pallas_call(
        _logits_lse_kernel,
        out_shape=(
            jax.ShapeDtypeStruct((M_p, vocab_p), jnp.float32),
            jax.ShapeDtypeStruct((M_p, 1), jnp.float32),
        ),
        grid_spec=pltpu.PrefetchScalarGridSpec(
            num_scalar_prefetch=0,
            grid=(M_p // tm, num_v),
            in_specs=[
                pl.BlockSpec((tm, d_model), lambda i, j: (i, 0)),   # x row tile
                pl.BlockSpec((d_model, tv), lambda i, j: (0, j)),   # weight tile
                pl.BlockSpec((1, tv), lambda i, j: (0, j)),         # bias tile
            ],
            out_specs=[
                pl.BlockSpec((tm, tv), lambda i, j: (i, j)),        # raw logits
                pl.BlockSpec((tm, 1), lambda i, j: (i, 0)),         # per-row LSE
            ],
            scratch_shapes=[
                pltpu.VMEM((tm, 1), jnp.float32),   # running max
                pltpu.VMEM((tm, 1), jnp.float32),   # running sum of exp
            ],
        ),
        compiler_params=pltpu.CompilerParams(
            dimension_semantics=("parallel", "arbitrary"),
            vmem_limit_bytes=vmem_limit1,
        ),
    )(x2, w_p, b_p)

    # ---- pass 2: streamed correction (logits - lse) in f32, cast to out ----
    tm2 = tm
    tv2 = tv

    def _est2(tv_):
        return 2 * tm2 * tv_ * 4 + 2 * tm2 * tv_ * out_bytes + 2 * 8 * 128 * 4

    # Grow the vocab tile for fewer grid steps / lane-dense stores, VMEM allowing.
    while (tv2 * 2 <= min(vocab_p, 4096) and vocab_p % (tv2 * 2) == 0
           and _est2(tv2 * 2) <= vmem_cap):
        tv2 *= 2
    vmem_limit2 = int(min(vmem_cap, max(int(1.5 * _est2(tv2)), 32 * 1024 * 1024)))

    out = pl.pallas_call(
        _sub_lse_kernel,
        out_shape=jax.ShapeDtypeStruct((M_p, vocab_p), out_dtype),
        grid_spec=pltpu.PrefetchScalarGridSpec(
            num_scalar_prefetch=0,
            grid=(M_p // tm2, vocab_p // tv2),
            in_specs=[
                pl.BlockSpec((tm2, tv2), lambda i, j: (i, j)),
                pl.BlockSpec((tm2, 1), lambda i, j: (i, 0)),
            ],
            out_specs=pl.BlockSpec((tm2, tv2), lambda i, j: (i, j)),
        ),
        compiler_params=pltpu.CompilerParams(
            dimension_semantics=("parallel", "parallel"),
            vmem_limit_bytes=vmem_limit2,
        ),
    )(logits_f32, lse)

    out = out[:M, :vocab]
    return out.reshape(batch, seq, vocab)


def generator_forward(x, w, b, **kwargs):
    """One-shot convenience wrapper (prefer pre-staging params once)."""
    w_p, b_p, vocab, tv = prepare_generator_params(w, b)
    return generator_forward_prepared(x, w_p, b_p, vocab, tv, **kwargs)


if __name__ == "__main__":
    # Small deterministic shapes consistent with Generator(d_model, vocab).
    batch, seq, d_model, vocab = 2, 8, 32, 128

    key = jax.random.PRNGKey(0)
    kx, kw, kb = jax.random.split(key, 3)

    x = jax.random.normal(kx, (batch, seq, d_model), dtype=jnp.float32)
    # nn.Linear(d_model, vocab): weight (vocab, d_model), bias (vocab,).
    # Stored pre-transposed as (d_model, vocab) for the kernel layout.
    w_t = (jax.random.normal(kw, (vocab, d_model), dtype=jnp.float32)
           * (1.0 / jnp.sqrt(d_model))).T
    b = jax.random.normal(kb, (vocab,), dtype=jnp.float32) * 0.01

    # Pre-stage parameters ONCE (bf16 cast + vocab padding are not per-call).
    w_p, b_p, vocab_sz, tv = prepare_generator_params(w_t, b)

    fwd = jax.jit(functools.partial(generator_forward_prepared,
                                    vocab=vocab_sz, tv=tv))
    out = fwd(x, w_p, b_p)
    jax.block_until_ready(out)

    # Sanity check against the pure-f32 JAX reference (kernel matmul runs in
    # bf16 with f32 accumulation, so use a modest tolerance).
    ref = jax.nn.log_softmax(x @ w_t + b, axis=-1)
    assert out.shape == (batch, seq, vocab)
    assert out.dtype == x.dtype
    assert jnp.allclose(out, ref, atol=5e-2, rtol=5e-2), float(
        jnp.max(jnp.abs(out - ref)))

    print("KERNEL_OK")
</pallas_src>

<mosaic_0001>
module attributes {stable_mosaic.version = 11 : i64} {
  func.func @_sub_lse_kernel(%arg0: i32, %arg1: i32, %arg2: memref<16x128xf32, #tpu.memory_space<vmem>>, %arg3: memref<16x1xf32, #tpu.memory_space<vmem>>, %arg4: memref<16x128xf32, #tpu.memory_space<vmem>>) attributes {dimension_semantics = [#tpu.dimension_semantics<parallel>, #tpu.dimension_semantics<parallel>], iteration_bounds = array<i64: 1, 1>, scalar_prefetch = 0 : i64, scratch_operands = 0 : i64, tpu.core_type = #tpu.core_type<tc>, window_params = [{transform_indices = @transform_0, window_bounds = array<i64: 16, 128>}, {transform_indices = @transform_1, window_bounds = array<i64: 16, 1>}, {transform_indices = @transform_2, window_bounds = array<i64: 16, 128>}]} {
    %c0 = arith.constant 0 : index
    %c0_0 = arith.constant 0 : index
    %0 = vector.load %arg2[%c0, %c0_0] : memref<16x128xf32, #tpu.memory_space<vmem>>, vector<16x128xf32>
    %c0_1 = arith.constant 0 : index
    %c0_2 = arith.constant 0 : index
    %1 = vector.load %arg3[%c0_1, %c0_2] : memref<16x1xf32, #tpu.memory_space<vmem>>, vector<16x1xf32>
    %2 = vector.broadcast %1 : vector<16x1xf32> to vector<16x128xf32>
    %3 = arith.subf %0, %2 : vector<16x128xf32>
    %c0_3 = arith.constant 0 : index
    %c0_4 = arith.constant 0 : index
    %4 = vector.load %arg4[%c0_3, %c0_4] : memref<16x128xf32, #tpu.memory_space<vmem>>, vector<16x128xf32>
    tpu.vector_store %arg4[%c0_3, %c0_4], %3 {strides = array<i32>} : memref<16x128xf32, #tpu.memory_space<vmem>>, vector<16x128xf32>,
    return
  }
  func.func @transform_0(%arg0: i32, %arg1: i32) -> (i32, i32) {
    %c0_i32 = arith.constant 0 : i32
    return %arg0, %arg1 : i32, i32
  }
  func.func @transform_1(%arg0: i32, %arg1: i32) -> (i32, i32) {
    %c0_i32 = arith.constant 0 : i32
    %c0_i32_0 = arith.constant 0 : i32
    return %arg0, %c0_i32 : i32, i32
  }
  func.func @transform_2(%arg0: i32, %arg1: i32) -> (i32, i32) {
    %c0_i32 = arith.constant 0 : i32
    return %arg0, %arg1 : i32, i32
  }
}

module attributes {stable_mosaic.version = 11 : i64} {
  func.func @_logits_lse_kernel(%arg0: i32, %arg1: i32, %arg2: memref<16x32xbf16, #tpu.memory_space<vmem>>, %arg3: memref<32x128xbf16, #tpu.memory_space<vmem>>, %arg4: memref<1x128xf32, #tpu.memory_space<vmem>>, %arg5: memref<16x128xf32, #tpu.memory_space<vmem>>, %arg6: memref<16x1xf32, #tpu.memory_space<vmem>>, %arg7: memref<16x1xf32, #tpu.memory_space<vmem>>, %arg8: memref<16x1xf32, #tpu.memory_space<vmem>>) attributes {dimension_semantics = [#tpu.dimension_semantics<parallel>, #tpu.dimension_semantics<arbitrary>], iteration_bounds = array<i64: 1, 1>, scalar_prefetch = 0 : i64, scratch_operands = 2 : i64, tpu.core_type = #tpu.core_type<tc>, window_params = [{transform_indices = @transform_0, window_bounds = array<i64: 16, 32>}, {transform_indices = @transform_1, window_bounds = array<i64: 32, 128>}, {transform_indices = @transform_2, window_bounds = array<i64: 1, 128>}, {transform_indices = @transform_3, window_bounds = array<i64: 16, 128>}, {transform_indices = @transform_4, window_bounds = array<i64: 16, 1>}]} {
    %c0_i32 = arith.constant 0 : i32
    %0 = arith.cmpi eq, %arg1, %c0_i32 : i32
    %1 = arith.extui %0 : i1 to i32
    %c0_i32_0 = arith.constant 0 : i32
    %2 = arith.cmpi ne, %1, %c0_i32_0 : i32
    scf.if %2 {
      %cst_20 = arith.constant 0xFF800000 : f32
      %29 = vector.broadcast %cst_20 : f32 to vector<16x1xf32>
      %c0_21 = arith.constant 0 : index
      %c0_22 = arith.constant 0 : index
      %30 = vector.load %arg7[%c0_21, %c0_22] : memref<16x1xf32, #tpu.memory_space<vmem>>, vector<16x1xf32>
      tpu.vector_store %arg7[%c0_21, %c0_22], %29 {strides = array<i32>} : memref<16x1xf32, #tpu.memory_space<vmem>>, vector<16x1xf32>,
      %cst_23 = arith.constant 0.000000e+00 : f32
      %31 = vector.broadcast %cst_23 : f32 to vector<16x1xf32>
      %c0_24 = arith.constant 0 : index
      %c0_25 = arith.constant 0 : index
      %32 = vector.load %arg8[%c0_24, %c0_25] : memref<16x1xf32, #tpu.memory_space<vmem>>, vector<16x1xf32>
      tpu.vector_store %arg8[%c0_24, %c0_25], %31 {strides = array<i32>} : memref<16x1xf32, #tpu.memory_space<vmem>>, vector<16x1xf32>,
    } else {
    }
    %c0 = arith.constant 0 : index
    %c0_1 = arith.constant 0 : index
    %3 = vector.load %arg2[%c0, %c0_1] : memref<16x32xbf16, #tpu.memory_space<vmem>>, vector<16x32xbf16>
    %c0_2 = arith.constant 0 : index
    %c0_3 = arith.constant 0 : index
    %4 = vector.load %arg3[%c0_2, %c0_3] : memref<32x128xbf16, #tpu.memory_space<vmem>>, vector<32x128xbf16>
    %cst = arith.constant dense<0.000000e+00> : vector<16x128xf32>
    %5 = tpu.matmul %3, %4, %cst {dimension_numbers = #tpu.dot_dimension_numbers<[1], [0], [0], [1], [0, 0, 1, 1], [], []>} : vector<16x32xbf16>, vector<32x128xbf16>, vector<16x128xf32> -> vector<16x128xf32>
    %c0_4 = arith.constant 0 : index
    %c0_5 = arith.constant 0 : index
    %6 = vector.load %arg4[%c0_4, %c0_5] : memref<1x128xf32, #tpu.memory_space<vmem>>, vector<1x128xf32>
    %7 = vector.broadcast %6 : vector<1x128xf32> to vector<16x128xf32>
    %8 = arith.addf %5, %7 : vector<16x128xf32>
    %c0_6 = arith.constant 0 : index
    %c0_7 = arith.constant 0 : index
    %9 = vector.load %arg7[%c0_6, %c0_7] : memref<16x1xf32, #tpu.memory_space<vmem>>, vector<16x1xf32>
    %cst_8 = arith.constant dense<0xFF800000> : vector<16xf32>
    %10 = vector.multi_reduction <maximumf>, %8, %cst_8 [1] : vector<16x128xf32> to vector<16xf32>
    %11 = vector.shape_cast %10 : vector<16xf32> to vector<16x1xf32>
    %12 = arith.maximumf %9, %11 : vector<16x1xf32>
    %c0_9 = arith.constant 0 : index
    %c0_10 = arith.constant 0 : index
    %13 = vector.load %arg8[%c0_9, %c0_10] : memref<16x1xf32, #tpu.memory_space<vmem>>, vector<16x1xf32>
    %14 = arith.subf %9, %12 : vector<16x1xf32>
    %15 = math.exp %14 : vector<16x1xf32>
    %16 = arith.mulf %13, %15 : vector<16x1xf32>
    %17 = vector.broadcast %12 : vector<16x1xf32> to vector<16x128xf32>
    %18 = arith.subf %8, %17 : vector<16x128xf32>
    %19 = math.exp %18 : vector<16x128xf32>
    %cst_11 = arith.constant dense<0.000000e+00> : vector<16xf32>
    %20 = vector.multi_reduction <add>, %19, %cst_11 [1] : vector<16x128xf32> to vector<16xf32>
    %21 = vector.shape_cast %20 : vector<16xf32> to vector<16x1xf32>
    %22 = arith.addf %16, %21 : vector<16x1xf32>
    %c0_12 = arith.constant 0 : index
    %c0_13 = arith.constant 0 : index
    %23 = vector.load %arg8[%c0_12, %c0_13] : memref<16x1xf32, #tpu.memory_space<vmem>>, vector<16x1xf32>
    tpu.vector_store %arg8[%c0_12, %c0_13], %22 {strides = array<i32>} : memref<16x1xf32, #tpu.memory_space<vmem>>, vector<16x1xf32>,
    %c0_14 = arith.constant 0 : index
    %c0_15 = arith.constant 0 : index
    %24 = vector.load %arg7[%c0_14, %c0_15] : memref<16x1xf32, #tpu.memory_space<vmem>>, vector<16x1xf32>
    tpu.vector_store %arg7[%c0_14, %c0_15], %12 {strides = array<i32>} : memref<16x1xf32, #tpu.memory_space<vmem>>, vector<16x1xf32>,
    %c0_16 = arith.constant 0 : index
    %c0_17 = arith.constant 0 : index
    %25 = vector.load %arg5[%c0_16, %c0_17] : memref<16x128xf32, #tpu.memory_space<vmem>>, vector<16x128xf32>
    tpu.vector_store %arg5[%c0_16, %c0_17], %8 {strides = array<i32>} : memref<16x128xf32, #tpu.memory_space<vmem>>, vector<16x128xf32>,
    %c0_i32_18 = arith.constant 0 : i32
    %26 = arith.cmpi eq, %arg1, %c0_i32_18 : i32
    %27 = arith.extui %26 : i1 to i32
    %c0_i32_19 = arith.constant 0 : i32
    %28 = arith.cmpi ne, %27, %c0_i32_19 : i32
    scf.if %28 {
      %c0_20 = arith.constant 0 : index
      %c0_21 = arith.constant 0 : index
      %29 = vector.load %arg7[%c0_20, %c0_21] : memref<16x1xf32, #tpu.memory_space<vmem>>, vector<16x1xf32>
      %c0_22 = arith.constant 0 : index
      %c0_23 = arith.constant 0 : index
      %30 = vector.load %arg8[%c0_22, %c0_23] : memref<16x1xf32, #tpu.memory_space<vmem>>, vector<16x1xf32>
      %31 = math.log %30 : vector<16x1xf32>
      %32 = arith.addf %29, %31 : vector<16x1xf32>
      %c0_24 = arith.constant 0 : index
      %c0_25 = arith.constant 0 : index
      %33 = vector.load %arg6[%c0_24, %c0_25] : memref<16x1xf32, #tpu.memory_space<vmem>>, vector<16x1xf32>
      tpu.vector_store %arg6[%c0_24, %c0_25], %32 {strides = array<i32>} : memref<16x1xf32, #tpu.memory_space<vmem>>, vector<16x1xf32>,
    } else {
    }
    return
  }
  func.func @transform_0(%arg0: i32, %arg1: i32) -> (i32, i32) {
    %c0_i32 = arith.constant 0 : i32
    %c0_i32_0 = arith.constant 0 : i32
    return %arg0, %c0_i32 : i32, i32
  }
  func.func @transform_1(%arg0: i32, %arg1: i32) -> (i32, i32) {
    %c0_i32 = arith.constant 0 : i32
    %c0_i32_0 = arith.constant 0 : i32
    return %c0_i32, %arg1 : i32, i32
  }
  func.func @transform_2(%arg0: i32, %arg1: i32) -> (i32, i32) {
    %c0_i32 = arith.constant 0 : i32
    %c0_i32_0 = arith.constant 0 : i32
    return %c0_i32, %arg1 : i32, i32
  }
  func.func @transform_3(%arg0: i32, %arg1: i32) -> (i32, i32) {
    %c0_i32 = arith.constant 0 : i32
    return %arg0, %arg1 : i32, i32
  }
  func.func @transform_4(%arg0: i32, %arg1: i32) -> (i32, i32) {
    %c0_i32 = arith.constant 0 : i32
    %c0_i32_0 = arith.constant 0 : i32
    return %arg0, %c0_i32 : i32, i32
  }
}

</mosaic_0001>

<llo_original>
// kernel: generator_forward_prepared.3
$region0: #{generator_forward_prepared.3}
  #allocation0 [shape = 'u32[]', space=smem, size = 0x4, offset = 0x4, fixed_abs, tag = 'smem constant byte address 0x4 - core index']
  #allocation1 [shape = 'u32[72,128]{1,0:T(1,128)}', space=vmem, size = 0x9000, scoped, tag = 'internal scratch']
  %s0 = inlined_call_operand.vmem [shape: f32[16,128], index: 0, kind: input, shape index: {}]
  %s1 = inlined_call_operand.vmem [shape: f32[16,1], index: 1, kind: input, shape index: {}]
  %s2 = inlined_call_operand.hbm [shape: f32[16,128], index: 2, kind: output, shape index: {}]
  %s3 = sld [smem:[#allocation0]]
  $region18: #{generator_forward_prepared.3} parent=0
    _
  %s5 = ssub.s32 1, %s3
  %s6 = scalar_select 0, %s5, %s3
  $region1: #{generator_forward_prepared.3} parent=0
    #allocation2 [shape = 'u8[8192]{0}', space=vmem, size = 0x2000, scoped, tag = 'output window, operand 0, single buffered']
    #allocation3 [shape = 's32[1]{0}', space=sflag, size = 0x4, scoped, tag = 'scoped memory for generator_forward_prepared.3']
    %7 = vsyncpa [#allocation3], 0
    // Predicated region
    $region2: #{generator_forward_prepared.3} parent=1 // pred_check
      _
    $region3: #{generator_forward_prepared.3} parent=1 // pred_check_branch
      %9 = sbr.rel (0) target = $region5
    $region4: #{generator_forward_prepared.3} parent=1 // pred_region
      _
    $region5: #{generator_forward_prepared.3} parent=1 // pred_fallthru
      _
    // Predicated region
    $region6: #{generator_forward_prepared.3} parent=1 // pred_check
      _
    $region7: #{generator_forward_prepared.3} parent=1 // pred_check_branch
      %11 = sbr.rel (0) target = $region9
    $region8: #{generator_forward_prepared.3} parent=1 // pred_region
      _
    $region9: #{generator_forward_prepared.3} parent=1 // pred_fallthru
      _
    %v12 = vld [vmem:[%s0] sm:$0xff]
    %v13 = vld [vmem:[%s0 + $0x8] sm:$0xff]
    %v14 = vld [vmem:[%s1] sm:$0xff]
    %v15 = vld [vmem:[%s1 + $0x8] sm:$0xff]
    %17 = vset.pattern.permute.xlu0 0
    %18 = vperm.xlu0 %17, %v14
    %v19 = vpop.permute.xlu0 %18
    %22 = vset.pattern.permute.xlu0 0
    %23 = vperm.xlu0 %22, %v15
    %v24 = vpop.permute.xlu0 %23
    %v26 = vsub.f32 %v12, %v19
    %v27 = vsub.f32 %v13, %v24
    %28 = vst [vmem:[#allocation2] sm:$0xff] %v26
    %29 = vst [vmem:[#allocation2 + $0x8] sm:$0xff] %v27
    // Predicated region
    $region10: #{generator_forward_prepared.3} parent=1 // pred_check
      _
    $region11: #{generator_forward_prepared.3} parent=1 // pred_check_branch
      %31 = sbr.rel (0) target = $region13
    $region12: #{generator_forward_prepared.3} parent=1 // pred_region
      %33 = vsyncadd [#allocation3], 0
      %s34 = sshll.u32 [#allocation2], 4
      %s35 = int_to_ptr.vmem [resolvable:$true] %s34
      %s36 = sshll.u32 %s2, 4
      %s37 = int_to_ptr.hbm [resolvable:$true] %s36
      %42 = dma.vmem_to_hbm [thread:$0]  %s35, 256, %s37, [#allocation3], 128, 128, 8
    $region13: #{generator_forward_prepared.3} parent=1 // pred_fallthru
      _
    // Predicated region
    $region14: #{generator_forward_prepared.3} parent=1 // pred_check
      _
    $region15: #{generator_forward_prepared.3} parent=1 // pred_check_branch
      %44 = sbr.rel (0) target = $region17
    $region16: #{generator_forward_prepared.3} parent=1 // pred_region
      %46 = dma.done [#allocation3], 256
    $region17: #{generator_forward_prepared.3} parent=1 // pred_fallthru
      _
    %47 = vsyncpa [#allocation3], 1

// kernel: generator_forward_prepared.2
$region0: #{generator_forward_prepared.2}
  #allocation0 [shape = 'u32[]', space=smem, size = 0x4, offset = 0x4, fixed_abs, tag = 'smem constant byte address 0x4 - core index']
  #allocation1 [shape = 'u32[72,128]{1,0:T(1,128)}', space=vmem, size = 0x9000, scoped, tag = 'internal scratch']
  #allocation2 [shape = 'f32[16,1]{1,0:T(8,128)}', space=vmem, size = 0x2000, scoped, tag = 'scratch operand']
  #allocation3 [shape = 'f32[16,1]{1,0:T(8,128)}', space=vmem, size = 0x2000, scoped, tag = 'scratch operand']
  %s0 = inlined_call_operand.vmem [shape: bf16[16,32], index: 0, kind: input, shape index: {}]
  %s1 = inlined_call_operand.vmem [shape: bf16[32,128], index: 1, kind: input, shape index: {}]
  %s2 = inlined_call_operand.vmem [shape: f32[1,128], index: 2, kind: input, shape index: {}]
  %s3 = inlined_call_operand.vmem [shape: f32[16,128], index: 3, kind: output, shape index: {0}]
  %s4 = inlined_call_operand.vmem [shape: f32[16,1], index: 4, kind: output, shape index: {1}]
  %5 = xla_tuple %s3, %s4
  %s6 = sld [smem:[#allocation0]]
  $region38: #{generator_forward_prepared.2} parent=0
    _
  %s8 = ssub.s32 1, %s6
  %s9 = scalar_select 0, %s8, %s6
  // Predicated region
  $region2: #{generator_forward_prepared.2} parent=0 // pred_check
    _
  $region3: #{generator_forward_prepared.2} parent=0 // pred_check_branch
    %11 = sbr.rel (0) target = $region5
  $region4: #{generator_forward_prepared.2} parent=0 // pred_region
    _
  $region5: #{generator_forward_prepared.2} parent=0 // pred_fallthru
    _
  // Predicated region
  $region6: #{generator_forward_prepared.2} parent=0 // pred_check
    _
  $region7: #{generator_forward_prepared.2} parent=0 // pred_check_branch
    %13 = sbr.rel (0) target = $region9
  $region8: #{generator_forward_prepared.2} parent=0 // pred_region
    _
  $region9: #{generator_forward_prepared.2} parent=0 // pred_fallthru
    _
  // Predicated region
  $region10: #{generator_forward_prepared.2} parent=0 // pred_check
    _
  $region11: #{generator_forward_prepared.2} parent=0 // pred_check_branch
    %15 = sbr.rel (0) target = $region13
  $region12: #{generator_forward_prepared.2} parent=0 // pred_region
    _
  $region13: #{generator_forward_prepared.2} parent=0 // pred_fallthru
    _
  %p17 = scmp.eq.s32.totalorder 0, 0
  // Predicated region
  $region14: #{generator_forward_prepared.2} parent=0 // pred_check
    %p18 = pneg %p17
  $region15: #{generator_forward_prepared.2} parent=0 // pred_check_branch
    %20 = sbr.rel (%p18) target = $region17
  $region16: #{generator_forward_prepared.2} parent=0 // pred_region
    %vm21 = vcmask 7168
    %22 = vst.msk [vmem:[#allocation2] sm:$0xff] %vm21, -inf
    %23 = vst.msk [vmem:[#allocation2 + $0x8] sm:$0xff] %vm21, -inf
    %24 = vst.msk [vmem:[#allocation3] sm:$0xff] %vm21, 0.0
    %25 = vst.msk [vmem:[#allocation3 + $0x8] sm:$0xff] %vm21, 0.0
  $region17: #{generator_forward_prepared.2} parent=0 // pred_fallthru
    _
  %v26 = vld [vmem:[%s0] sm:$0xf]
  %v27 = vld [vmem:[%s0 + $0x4] sm:$0xf]
  %v28 = vld [vmem:[%s1] sm:$0xf]
  %v29 = vld [vmem:[%s1 + $0x4] sm:$0xf]
  %v30 = vld [vmem:[%s1 + $0x8] sm:$0xf]
  %v31 = vld [vmem:[%s1 + $0xc] sm:$0xf]
  %v32 = vld [vmem:[%s2] sm:$0x1]
  %v34 = vperm.slane %v32, 0
  %v38 = vunpack.c.l.b16 %v26
  %v39 = vunpack.c.l.b16 %v27
  %v40 = vpack.c.b16 %v39, %v38
  %v45 = vunpack.c.l.b16 %v28
  %v46 = vunpack.c.l.b16 %v29
  %v47 = vunpack.c.l.b16 %v30
  %v48 = vunpack.c.l.b16 %v31
  %v49 = vpack.c.b16 %v46, %v45
  %v50 = vpack.c.b16 %v48, %v47
  %vm53 = vcmask 261120
  %v55 = vsel %vm53, %v40, 0
  %57 = vmatpush.bf16.msra.mxu0 0
  %58 = vmatpush.bf16.msra.mxu0 0
  %59 = vmatpush.bf16.msra.mxu0 0
  %60 = vmatpush.bf16.msra.mxu0 0
  %61 = vmatpush.bf16.msra.mxu0 0
  %62 = vmatpush.bf16.msra.mxu0 0
  %63 = vmatpush.bf16.msra.mxu0 %v50
  %64 = vmatpush.bf16.msra.mxu0 %v49
  %65 = vmatmul.bf16.gmra.mxu0 %v55
  %v66 = vpop.f32.mrf.mxu0
  %v67 = vadd.f32 %v34, %v66
  %v68 = vpop.f32.mrf.mxu0
  %v69 = vadd.f32 %v34, %v68
  %70 = vdwg.mxu0
  %v71 = vld [vmem:[#allocation2] sm:$0xff]
  %v72 = vld [vmem:[#allocation2 + $0x8] sm:$0xff]
  %73 = vmax.xlane.f32.xlu0 %v67
  %v74 = vpop.xlane.xlu0 %73
  %75 = vmax.xlane.f32.xlu0 %v69
  %v76 = vpop.xlane.xlu0 %75
  %v77 = vmax.f32 %v71, %v74
  %v78 = vmax.f32 %v72, %v76
  %v79 = vld [vmem:[#allocation3] sm:$0xff]
  %v80 = vld [vmem:[#allocation3 + $0x8] sm:$0xff]
  %v81 = vsub.f32 %v71, %v77
  %v82 = vsub.f32 %v72, %v78
  %v83 = vmul.f32 %v81, 1.442695
  %v84 = vpow.pop %v83
  %v85 = vmul.f32 %v82, 1.442695
  %v86 = vpow.pop %v85
  %v87 = vmul.f32 %v79, %v84
  %v88 = vmul.f32 %v80, %v86
  %90 = vset.pattern.permute.xlu0 0
  %91 = vperm.xlu0 %90, %v77
  %v92 = vpop.permute.xlu0 %91
  %95 = vset.pattern.permute.xlu0 0
  %96 = vperm.xlu0 %95, %v78
  %v97 = vpop.permute.xlu0 %96
  %v99 = vsub.f32 %v67, %v92
  %v100 = vsub.f32 %v69, %v97
  %v101 = vmul.f32 %v99, 1.442695
  %v102 = vpow.pop %v101
  %v103 = vmul.f32 %v100, 1.442695
  %v104 = vpow.pop %v103
  %105 = vadd.xlane.f32.xlu0 %v102
  %v106 = vpop.xlane.xlu0 %105
  %107 = vadd.xlane.f32.xlu0 %v104
  %v108 = vpop.xlane.xlu0 %107
  %v109 = vadd.f32 %v87, %v106
  %v110 = vadd.f32 %v88, %v108
  %vm111 = vcmask 7168
  %112 = vst.msk [vmem:[#allocation3] sm:$0xff] %vm111, %v109
  %113 = vst.msk [vmem:[#allocation3 + $0x8] sm:$0xff] %vm111, %v110
  %114 = vst.msk [vmem:[#allocation2] sm:$0xff] %vm111, %v77
  %115 = vst.msk [vmem:[#allocation2 + $0x8] sm:$0xff] %vm111, %v78
  %116 = vst [vmem:[%s3] sm:$0xff] %v67
  %117 = vst [vmem:[%s3 + $0x8] sm:$0xff] %v69
  // Predicated region
  $region18: #{generator_forward_prepared.2} parent=0 // pred_check
    %p118 = pneg %p17
  $region19: #{generator_forward_prepared.2} parent=0 // pred_check_branch
    %120 = sbr.rel (%p118) target = $region21
  $region20: #{generator_forward_prepared.2} parent=0 // pred_region
    %v121 = vld [vmem:[#allocation2] sm:$0xff]
    %v122 = vld [vmem:[#allocation2 + $0x8] sm:$0xff]
    %v123 = vld [vmem:[#allocation3] sm:$0xff]
    %v124 = vld [vmem:[#allocation3 + $0x8] sm:$0xff]
    %v125 = vlog2.pop %v123
    %v126 = vmul.f32 %v125, 0.6931472
    %v127 = vlog2.pop %v124
    %v128 = vmul.f32 %v127, 0.6931472
    %v129 = vadd.f32 %v121, %v126
    %v130 = vadd.f32 %v122, %v128
    %131 = vst.msk [vmem:[%s4] sm:$0xff] %vm111, %v129
    %132 = vst.msk [vmem:[%s4 + $0x8] sm:$0xff] %vm111, %v130
  $region21: #{generator_forward_prepared.2} parent=0 // pred_fallthru
    _
  // Predicated region
  $region22: #{generator_forward_prepared.2} parent=0 // pred_check
    _
  $region23: #{generator_forward_prepared.2} parent=0 // pred_check_branch
    %134 = sbr.rel (0) target = $region25
  $region24: #{generator_forward_prepared.2} parent=0 // pred_region
    _
  $region25: #{generator_forward_prepared.2} parent=0 // pred_fallthru
    _
  // Predicated region
  $region26: #{generator_forward_prepared.2} parent=0 // pred_check
    _
  $region27: #{generator_forward_prepared.2} parent=0 // pred_check_branch
    %136 = sbr.rel (0) target = $region29
  $region28: #{generator_forward_prepared.2} parent=0 // pred_region
    _
  $region29: #{generator_forward_prepared.2} parent=0 // pred_fallthru
    _
  // Predicated region
  $region30: #{generator_forward_prepared.2} parent=0 // pred_check
    _
  $region31: #{generator_forward_prepared.2} parent=0 // pred_check_branch
    %138 = sbr.rel (0) target = $region33
  $region32: #{generator_forward_prepared.2} parent=0 // pred_region
    _
  $region33: #{generator_forward_prepared.2} parent=0 // pred_fallthru
    _
  // Predicated region
  $region34: #{generator_forward_prepared.2} parent=0 // pred_check
    _
  $region35: #{generator_forward_prepared.2} parent=0 // pred_check_branch
    %140 = sbr.rel (0) target = $region37
  $region36: #{generator_forward_prepared.2} parent=0 // pred_region
    _
  $region37: #{generator_forward_prepared.2} parent=0 // pred_fallthru
    _

</llo_original>
